<compile_context>
chip_gen: v7x
topology: tpu7x:2x2x1
jax: 0.10.0
libtpu: 0.0.40
codegen_flags: <defaults>
</compile_context>

<pallas_src>
import functools

import jax
import jax.numpy as jnp
from jax.experimental import pallas as pl
from jax.experimental.pallas import tpu as pltpu

SUBLANE = 8      # f32 sublane count
MXU_TILE = 256   # default batch-tile rows when gridding (full MXU rows on v6e/v7x)


def _round_up(x, m):
    return (x + m - 1) // m * m


def _fused_mlp_kernel(*refs, num_layers, compute_dtype):
    """One batch tile: x -> (Linear, ReLU) x (L-1) -> Linear, fully in-kernel.

    refs = (x_ref, w0_ref, b0_ref, w1_ref, b1_ref, ..., o_ref).
    Matmuls accumulate in f32 regardless of `compute_dtype` (weight dtype).
    """
    x_ref = refs[0]
    o_ref = refs[-1]
    h = x_ref[...]
    for layer in range(num_layers):
        w_ref = refs[1 + 2 * layer]
        b_ref = refs[2 + 2 * layer]
        lhs = h if h.dtype == compute_dtype else h.astype(compute_dtype)
        h = jnp.dot(lhs, w_ref[...], preferred_element_type=jnp.float32)
        h = h + b_ref[...]                       # (1, N) broadcasts over the tile
        if layer < num_layers - 1:
            h = jnp.maximum(h, 0.0)
    o_ref[...] = h.astype(o_ref.dtype)


def prepare_params(params, weight_dtype=jnp.float32):
    """One-time parameter prep — hoisted out of the per-call path (cache the result).

    params: list of (w [in, out], b [out]) per layer.
    `weight_dtype=jnp.bfloat16` unlocks the bf16-native MXU on v6e/v7x and halves
    resident weight VMEM; biases stay f32 (added after the f32 accumulation).
    """
    prepared = []
    for w, b in params:
        prepared.append((jnp.asarray(w, weight_dtype),
                         jnp.asarray(b, jnp.float32).reshape(1, -1)))
    return prepared


def fused_mlp_forward(x, prepared_params, *, tb=None):
    """Fused forward pass.  x: [B, In] f32; prepared_params from `prepare_params`."""
    B, in_features = x.shape
    num_layers = len(prepared_params)
    out_features = prepared_params[-1][0].shape[1]
    compute_dtype = prepared_params[0][0].dtype
    widths = [in_features] + [w.shape[1] for w, _ in prepared_params]
    hidden_widths = widths[1:-1]

    # --- Cost estimate from logical (unpadded) dims. ---
    flops = 0
    param_bytes = 0
    for w, b in prepared_params:
        k, n = w.shape
        flops += 2 * B * k * n
        param_bytes += int(w.size) * w.dtype.itemsize + int(b.size) * b.dtype.itemsize
    bytes_accessed = int(x.size) * x.dtype.itemsize + B * out_features * 4 + param_bytes
    cost = pl.CostEstimate(flops=flops, transcendentals=0, bytes_accessed=bytes_accessed)

    flat_params = [a for wb in prepared_params for a in wb]
    kernel = functools.partial(_fused_mlp_kernel,
                               num_layers=num_layers, compute_dtype=compute_dtype)

    # --- Batch tile selection (VMEM-aware). ---
    if tb is None:
        tb = B if B <= 2 * MXU_TILE else MXU_TILE
        # Double-buffered IO tiles + intermediate activations must fit under the
        # scoped VMEM limit on every generation, alongside single-buffered weights.
        per_row_bytes = 4 * (2 * (in_features + out_features) + sum(hidden_widths))
        budget = (24 << 20) - param_bytes
        if budget > 0 and per_row_bytes * tb > budget:
            tb = max(SUBLANE, (budget // per_row_bytes) // SUBLANE * SUBLANE)
    tb = min(tb, B)
    if tb < B and tb % SUBLANE:
        tb = _round_up(tb, SUBLANE)   # second-to-last block dim must be 8-aligned
    num_tiles = pl.cdiv(B, tb)

    # Explicit VMEM limit: IO tiles (double-buffered) + intermediates + resident
    # weights + headroom, clamped to [32 MiB default, 64 MiB (v7x physical/core)].
    footprint = (2 * tb * (in_features + out_features) * 4
                 + tb * sum(hidden_widths) * 4 + param_bytes)
    vmem_limit = int(min(max(footprint + (8 << 20), 32 << 20), 64 << 20))

    out_shape = jax.ShapeDtypeStruct((B, out_features), jnp.float32)

    if num_tiles == 1:
        # Single-tile path: no grid, no pipeline machinery; every operand is one
        # full-array block resident in VMEM, x / output passed unpadded.
        return pl.pallas_call(
            kernel,
            out_shape=out_shape,
            compiler_params=pltpu.CompilerParams(vmem_limit_bytes=vmem_limit),
            cost_estimate=cost,
        )(x, *flat_params)

    # Gridded path: tile only the batch axis ("parallel" => megacore sharding and
    # double-buffered activation DMA).  Weights/biases use a constant index_map and
    # Buffered(1): one resident copy per core instead of a useless double buffer.
    in_specs = [pl.BlockSpec((tb, in_features), lambda i: (i, 0))]
    for w, b in prepared_params:
        k, n = w.shape
        in_specs.append(pl.BlockSpec((k, n), lambda i: (0, 0),
                                     pipeline_mode=pl.Buffered(1)))
        in_specs.append(pl.BlockSpec((1, n), lambda i: (0, 0),
                                     pipeline_mode=pl.Buffered(1)))
    out_specs = pl.BlockSpec((tb, out_features), lambda i: (i, 0))

    return pl.pallas_call(
        kernel,
        out_shape=out_shape,
        grid_spec=pltpu.PrefetchScalarGridSpec(
            num_scalar_prefetch=0,
            grid=(num_tiles,),
            in_specs=in_specs,
            out_specs=out_specs,
        ),
        compiler_params=pltpu.CompilerParams(
            dimension_semantics=("parallel",),
            vmem_limit_bytes=vmem_limit,
        ),
        cost_estimate=cost,
    )(x, *flat_params)


def init_params(key, input_size, output_size, hidden_sizes):
    """Deterministic init matching nn.Linear's default (weights stored as [in, out])."""
    sizes = [input_size] + list(hidden_sizes) + [output_size]
    params = []
    for i in range(len(sizes) - 1):
        fan_in, fan_out = sizes[i], sizes[i + 1]
        key, kw, kb = jax.random.split(key, 3)
        bound = 1.0 / jnp.sqrt(fan_in)
        w = jax.random.uniform(kw, (fan_in, fan_out), jnp.float32, -bound, bound)
        b = jax.random.uniform(kb, (fan_out,), jnp.float32, -bound, bound)
        params.append((w, b))
    return params


def _reference(x, params):
    h = x
    for i, (w, b) in enumerate(params):
        h = h @ w + b.reshape(1, -1)
        if i < len(params) - 1:
            h = jnp.maximum(h, 0.0)
    return h


if __name__ == "__main__":
    # Small shapes consistent with the module: batch=8, input=16, hidden=[32, 32], output=8.
    input_size, output_size = 16, 8
    hidden_sizes = [32, 32]
    batch = 8

    key = jax.random.PRNGKey(0)
    key, kx = jax.random.split(key)
    x = jax.random.normal(kx, (batch, input_size), jnp.float32)
    raw_params = init_params(key, input_size, output_size, hidden_sizes)

    # --- f32 path, small batch -> single-tile (no-grid) kernel. ---
    params_f32 = prepare_params(raw_params)            # hoisted, done once & cached
    out = fused_mlp_forward(x, params_f32)
    jax.block_until_ready(out)
    ref = _reference(x, raw_params)
    assert out.shape == (batch, output_size)
    assert jnp.allclose(out, ref, atol=1e-5, rtol=1e-5)

    # --- f32 path, larger batch -> gridded kernel (Buffered(1) resident weights). ---
    big_batch = 768
    key, kx2 = jax.random.split(key)
    x_big = jax.random.normal(kx2, (big_batch, input_size), jnp.float32)
    out_big = fused_mlp_forward(x_big, params_f32)
    jax.block_until_ready(out_big)
    ref_big = _reference(x_big, raw_params)
    assert out_big.shape == (big_batch, output_size)
    assert jnp.allclose(out_big, ref_big, atol=1e-5, rtol=1e-5)

    # --- Optional bf16-weight path (v6e/v7x MXU-native); looser tolerance. ---
    params_bf16 = prepare_params(raw_params, weight_dtype=jnp.bfloat16)
    out_bf16 = fused_mlp_forward(x, params_bf16)
    jax.block_until_ready(out_bf16)
    assert jnp.allclose(out_bf16, ref, atol=1e-1, rtol=1e-1)

    print("KERNEL_OK")
</pallas_src>

<mosaic_0001>
module attributes {stable_mosaic.version = 11 : i64} {
  func.func @_fused_mlp_kernel(%arg0: memref<8x16xf32, #tpu.memory_space<vmem>>, %arg1: memref<16x32xf32, #tpu.memory_space<vmem>>, %arg2: memref<1x32xf32, #tpu.memory_space<vmem>>, %arg3: memref<32x32xf32, #tpu.memory_space<vmem>>, %arg4: memref<1x32xf32, #tpu.memory_space<vmem>>, %arg5: memref<32x8xf32, #tpu.memory_space<vmem>>, %arg6: memref<1x8xf32, #tpu.memory_space<vmem>>, %arg7: memref<8x8xf32, #tpu.memory_space<vmem>>) attributes {dimension_semantics = [], scalar_prefetch = 0 : i64, scratch_operands = 0 : i64, tpu.core_type = #tpu.core_type<tc>} {
    %c0 = arith.constant 0 : index
    %c0_0 = arith.constant 0 : index
    %0 = vector.load %arg0[%c0, %c0_0] : memref<8x16xf32, #tpu.memory_space<vmem>>, vector<8x16xf32>
    %c0_1 = arith.constant 0 : index
    %c0_2 = arith.constant 0 : index
    %1 = vector.load %arg1[%c0_1, %c0_2] : memref<16x32xf32, #tpu.memory_space<vmem>>, vector<16x32xf32>
    %cst = arith.constant dense<0.000000e+00> : vector<8x32xf32>
    %2 = tpu.matmul %0, %1, %cst {dimension_numbers = #tpu.dot_dimension_numbers<[1], [0], [0], [1], [0, 0, 1, 1], [], []>} : vector<8x16xf32>, vector<16x32xf32>, vector<8x32xf32> -> vector<8x32xf32>
    %c0_3 = arith.constant 0 : index
    %c0_4 = arith.constant 0 : index
    %3 = vector.load %arg2[%c0_3, %c0_4] : memref<1x32xf32, #tpu.memory_space<vmem>>, vector<1x32xf32>
    %4 = vector.broadcast %3 : vector<1x32xf32> to vector<8x32xf32>
    %5 = arith.addf %2, %4 : vector<8x32xf32>
    %cst_5 = arith.constant 0.000000e+00 : f32
    %6 = vector.broadcast %cst_5 : f32 to vector<8x32xf32>
    %7 = arith.maximumf %5, %6 : vector<8x32xf32>
    %c0_6 = arith.constant 0 : index
    %c0_7 = arith.constant 0 : index
    %8 = vector.load %arg3[%c0_6, %c0_7] : memref<32x32xf32, #tpu.memory_space<vmem>>, vector<32x32xf32>
    %cst_8 = arith.constant dense<0.000000e+00> : vector<8x32xf32>
    %9 = tpu.matmul %7, %8, %cst_8 {dimension_numbers = #tpu.dot_dimension_numbers<[1], [0], [0], [1], [0, 0, 1, 1], [], []>} : vector<8x32xf32>, vector<32x32xf32>, vector<8x32xf32> -> vector<8x32xf32>
    %c0_9 = arith.constant 0 : index
    %c0_10 = arith.constant 0 : index
    %10 = vector.load %arg4[%c0_9, %c0_10] : memref<1x32xf32, #tpu.memory_space<vmem>>, vector<1x32xf32>
    %11 = vector.broadcast %10 : vector<1x32xf32> to vector<8x32xf32>
    %12 = arith.addf %9, %11 : vector<8x32xf32>
    %cst_11 = arith.constant 0.000000e+00 : f32
    %13 = vector.broadcast %cst_11 : f32 to vector<8x32xf32>
    %14 = arith.maximumf %12, %13 : vector<8x32xf32>
    %c0_12 = arith.constant 0 : index
    %c0_13 = arith.constant 0 : index
    %15 = vector.load %arg5[%c0_12, %c0_13] : memref<32x8xf32, #tpu.memory_space<vmem>>, vector<32x8xf32>
    %cst_14 = arith.constant dense<0.000000e+00> : vector<8x8xf32>
    %16 = tpu.matmul %14, %15, %cst_14 {dimension_numbers = #tpu.dot_dimension_numbers<[1], [0], [0], [1], [0, 0, 1, 1], [], []>} : vector<8x32xf32>, vector<32x8xf32>, vector<8x8xf32> -> vector<8x8xf32>
    %c0_15 = arith.constant 0 : index
    %c0_16 = arith.constant 0 : index
    %17 = vector.load %arg6[%c0_15, %c0_16] : memref<1x8xf32, #tpu.memory_space<vmem>>, vector<1x8xf32>
    %18 = vector.broadcast %17 : vector<1x8xf32> to vector<8x8xf32>
    %19 = arith.addf %16, %18 : vector<8x8xf32>
    %c0_17 = arith.constant 0 : index
    %c0_18 = arith.constant 0 : index
    %20 = vector.load %arg7[%c0_17, %c0_18] : memref<8x8xf32, #tpu.memory_space<vmem>>, vector<8x8xf32>
    tpu.vector_store %arg7[%c0_17, %c0_18], %19 {strides = array<i32>} : memref<8x8xf32, #tpu.memory_space<vmem>>, vector<8x8xf32>,
    return
  }
}

</mosaic_0001>

<llo_original>
// kernel: tpu_custom_call.1
$region0: #{tpu_custom_call.1}
  #allocation0 [shape = 'u32[]', space=smem, size = 0x4, offset = 0x4, fixed_abs, tag = 'smem constant byte address 0x4 - core index']
  #allocation1 [shape = 'u32[144,128]{1,0:T(1,128)}', space=vmem, size = 0x12000, scoped, tag = 'internal scratch']
  %s0 = inlined_call_operand.hbm [shape: f32[8,16], index: 0, kind: input, shape index: {}]
  %s1 = inlined_call_operand.vmem [shape: f32[16,32], index: 1, kind: input, shape index: {}]
  %s2 = inlined_call_operand.vmem [shape: f32[1,32], index: 2, kind: input, shape index: {}]
  %s3 = inlined_call_operand.vmem [shape: f32[32,32], index: 3, kind: input, shape index: {}]
  %s4 = inlined_call_operand.vmem [shape: f32[1,32], index: 4, kind: input, shape index: {}]
  %s5 = inlined_call_operand.vmem [shape: f32[32,8], index: 5, kind: input, shape index: {}]
  %s6 = inlined_call_operand.vmem [shape: f32[1,8], index: 6, kind: input, shape index: {}]
  %s7 = inlined_call_operand.hbm [shape: f32[8,8], index: 7, kind: output, shape index: {}]
  %s8 = sld [smem:[#allocation0]]
  $region42: #{tpu_custom_call.1} parent=0
    _
  %s10 = ssub.s32 1, %s8
  %s11 = scalar_select 0, %s10, %s8
  $region1: #{tpu_custom_call.1} parent=0
    #allocation2 [shape = 'u8[4096]{0}', space=vmem, size = 0x1000, scoped, tag = 'input window, operand 0, single buffered']
    #allocation3 [shape = 's32[1]{0}', space=sflag, size = 0x4, scoped, tag = 'scoped memory for tpu_custom_call.1']
    #allocation4 [shape = 's32[1]{0}', space=sflag, size = 0x4, scoped, tag = 'scoped memory for tpu_custom_call.1']
    #allocation5 [shape = 'u8[4096]{0}', space=vmem, size = 0x1000, scoped, tag = 'output window, operand 0, single buffered']
    %12 = vsyncpa [#allocation3], 0
    %13 = vsyncpa [#allocation4], 0
    // Predicated region
    $region2: #{tpu_custom_call.1} parent=1 // pred_check
      _
    $region3: #{tpu_custom_call.1} parent=1 // pred_check_branch
      %15 = sbr.rel (0) target = $region5
    $region4: #{tpu_custom_call.1} parent=1 // pred_region
      %s17 = ssub.s32 128, 128
      %18 = vsyncadd [#allocation3], %s17
      %s20 = sshll.u32 [#allocation2], 4
      %s21 = int_to_ptr.vmem [resolvable:$true] %s20
      %23 = dma.hbm_to_vmem [thread:$0]  %s0, 128, %s21, [#allocation3]
    $region5: #{tpu_custom_call.1} parent=1 // pred_fallthru
      _
    // Predicated region
    $region6: #{tpu_custom_call.1} parent=1 // pred_check
      _
    $region7: #{tpu_custom_call.1} parent=1 // pred_check_branch
      %25 = sbr.rel (0) target = $region9
    $region8: #{tpu_custom_call.1} parent=1 // pred_region
      _
    $region9: #{tpu_custom_call.1} parent=1 // pred_fallthru
      _
    // Predicated region
    $region10: #{tpu_custom_call.1} parent=1 // pred_check
      _
    $region11: #{tpu_custom_call.1} parent=1 // pred_check_branch
      %27 = sbr.rel (0) target = $region13
    $region12: #{tpu_custom_call.1} parent=1 // pred_region
      _
    $region13: #{tpu_custom_call.1} parent=1 // pred_fallthru
      _
    // Predicated region
    $region14: #{tpu_custom_call.1} parent=1 // pred_check
      _
    $region15: #{tpu_custom_call.1} parent=1 // pred_check_branch
      %29 = sbr.rel (0) target = $region17
    $region16: #{tpu_custom_call.1} parent=1 // pred_region
      _
    $region17: #{tpu_custom_call.1} parent=1 // pred_fallthru
      _
    // Predicated region
    $region18: #{tpu_custom_call.1} parent=1 // pred_check
      _
    $region19: #{tpu_custom_call.1} parent=1 // pred_check_branch
      %31 = sbr.rel (0) target = $region21
    $region20: #{tpu_custom_call.1} parent=1 // pred_region
      _
    $region21: #{tpu_custom_call.1} parent=1 // pred_fallthru
      _
    // Predicated region
    $region22: #{tpu_custom_call.1} parent=1 // pred_check
      _
    $region23: #{tpu_custom_call.1} parent=1 // pred_check_branch
      %33 = sbr.rel (0) target = $region25
    $region24: #{tpu_custom_call.1} parent=1 // pred_region
      _
    $region25: #{tpu_custom_call.1} parent=1 // pred_fallthru
      _
    // Predicated region
    $region26: #{tpu_custom_call.1} parent=1 // pred_check
      _
    $region27: #{tpu_custom_call.1} parent=1 // pred_check_branch
      %35 = sbr.rel (0) target = $region29
    $region28: #{tpu_custom_call.1} parent=1 // pred_region
      _
    $region29: #{tpu_custom_call.1} parent=1 // pred_fallthru
      _
    // Predicated region
    $region30: #{tpu_custom_call.1} parent=1 // pred_check
      _
    $region31: #{tpu_custom_call.1} parent=1 // pred_check_branch
      %37 = sbr.rel (0) target = $region33
    $region32: #{tpu_custom_call.1} parent=1 // pred_region
      %38 = dma.done [#allocation3], 128
    $region33: #{tpu_custom_call.1} parent=1 // pred_fallthru
      _
    %v39 = vld [vmem:[#allocation2] sm:$0xff]
    %v40 = vld [vmem:[%s1] sm:$0xff]
    %v41 = vld [vmem:[%s1 + $0x8] sm:$0xff]
    %v42 = vld [vmem:[%s2] sm:$0x1]
    %v44 = vlaneseq
    %v45 = vshrl.u32 %v44, 7
    %v46 = vsub.s32 0, %v45
    %v47 = vrot.slane %v42, %v46
    %vm49 = vcmask 130048
    %v51 = vsel %vm49, %v39, 0
    %53 = vmatprep.subr.mxu0 0.0
    %54 = vmatpush1.msra.mxu0 %v40
    %55 = vmatprep.subr.mxu0 0.0
    %56 = vmatpush1.msra.mxu0 %v41
    %57 = vmatprep.subr.mxu0 0.0
    %58 = vmatpush1.msra.mxu0 0.0
    %59 = vmatprep.subr.mxu0 0.0
    %60 = vmatpush1.msra.mxu0 0.0
    %61 = vmatprep.subr.mxu0 0.0
    %62 = vmatpush1.msra.mxu0 0.0
    %63 = vmatprep.subr.mxu0 0.0
    %64 = vmatpush1.msra.mxu0 0.0
    %65 = vmatprep.subr.mxu0 0.0
    %66 = vmatpush1.msra.mxu0 0.0
    %67 = vmatprep.subr.mxu0 0.0
    %68 = vmatpush1.msra.mxu0 0.0
    %69 = vmatprep.subr.mxu0 0.0
    %70 = vmatpush1.msra.mxu0 0.0
    %71 = vmatprep.subr.mxu0 0.0
    %72 = vmatpush1.msra.mxu0 0.0
    %73 = vmatprep.subr.mxu0 0.0
    %74 = vmatpush1.msra.mxu0 0.0
    %75 = vmatprep.subr.mxu0 0.0
    %76 = vmatpush1.msra.mxu0 0.0
    %77 = vmatprep.subr.mxu0 0.0
    %78 = vmatpush1.msra.mxu0 0.0
    %79 = vmatprep.subr.mxu0 0.0
    %80 = vmatpush1.msra.mxu0 0.0
    %81 = vmatprep.subr.mxu0 0.0
    %82 = vmatpush1.msra.mxu0 0.0
    %83 = vmatprep.subr.mxu0 0.0
    %84 = vmatpush1.msra.mxu0 0.0
    %85 = vmatprep.subr.mxu0 0.0
    %86 = vmatpush1.msra.mxu0 0.0
    %87 = vmatprep.subr.mxu0 0.0
    %88 = vmatpush1.msra.mxu0 0.0
    %89 = vmatprep.subr.mxu0 0.0
    %90 = vmatpush1.msra.mxu0 0.0
    %91 = vmatprep.subr.mxu0 0.0
    %92 = vmatpush1.msra.mxu0 0.0
    %93 = vmatprep.subr.mxu0 0.0
    %94 = vmatpush1.msra.mxu0 0.0
    %95 = vmatprep.subr.mxu0 0.0
    %96 = vmatpush1.msra.mxu0 0.0
    %97 = vmatprep.subr.mxu0 0.0
    %98 = vmatpush1.msra.mxu0 0.0
    %99 = vmatprep.subr.mxu0 0.0
    %100 = vmatpush1.msra.mxu0 0.0
    %101 = vmatprep.subr.mxu0 0.0
    %102 = vmatpush1.msra.mxu0 0.0
    %103 = vmatprep.subr.mxu0 0.0
    %104 = vmatpush1.msra.mxu0 0.0
    %105 = vmatprep.subr.mxu0 0.0
    %106 = vmatpush1.msra.mxu0 0.0
    %107 = vmatprep.subr.mxu0 0.0
    %108 = vmatpush1.msra.mxu0 0.0
    %109 = vmatprep.subr.mxu0 0.0
    %110 = vmatpush1.msra.mxu0 0.0
    %111 = vmatprep.subr.mxu0 0.0
    %112 = vmatpush1.msra.mxu0 0.0
    %113 = vmatprep.subr.mxu0 0.0
    %114 = vmatpush1.msra.mxu0 0.0
    %115 = vmatprep.subr.mxu0 0.0
    %116 = vmatpush1.msra.mxu0 0.0
    %117 = vmatprep.mubr.f32.mxu0 0.0
    %118 = vmatmul.mubr.f32.gmra.mrb[0].mxu0 %v51
    %v119 = vpop.f32.mrb[0].mxu0
    %v120 = vadd.f32 %v47, %v119
    %v121 = vpop.f32.mrb[0].mxu0
    %122 = vdwg.mxu0
    %v123 = vmax.f32 %v120, 0.0
    %v124 = vld [vmem:[%s3] sm:$0xff]
    %v125 = vld [vmem:[%s3 + $0x8] sm:$0xff]
    %v126 = vld [vmem:[%s3 + $0x10] sm:$0xff]
    %v127 = vld [vmem:[%s3 + $0x18] sm:$0xff]
    %v128 = vld [vmem:[%s4] sm:$0x1]
    %v130 = vlaneseq
    %v131 = vshrl.u32 %v130, 7
    %v132 = vsub.s32 0, %v131
    %v133 = vrot.slane %v128, %v132
    %vm135 = vcmask 261120
    %v137 = vsel %vm135, %v123, 0
    %139 = vmatprep.subr.mxu0 0.0
    %140 = vmatpush1.msra.mxu0 %v124
    %141 = vmatprep.subr.mxu0 0.0
    %142 = vmatpush1.msra.mxu0 %v125
    %143 = vmatprep.subr.mxu0 0.0
    %144 = vmatpush1.msra.mxu0 %v126
    %145 = vmatprep.subr.mxu0 0.0
    %146 = vmatpush1.msra.mxu0 %v127
    %147 = vmatprep.subr.mxu0 0.0
    %148 = vmatpush1.msra.mxu0 0.0
    %149 = vmatprep.subr.mxu0 0.0
    %150 = vmatpush1.msra.mxu0 0.0
    %151 = vmatprep.subr.mxu0 0.0
    %152 = vmatpush1.msra.mxu0 0.0
    %153 = vmatprep.subr.mxu0 0.0
    %154 = vmatpush1.msra.mxu0 0.0
    %155 = vmatprep.subr.mxu0 0.0
    %156 = vmatpush1.msra.mxu0 0.0
    %157 = vmatprep.subr.mxu0 0.0
    %158 = vmatpush1.msra.mxu0 0.0
    %159 = vmatprep.subr.mxu0 0.0
    %160 = vmatpush1.msra.mxu0 0.0
    %161 = vmatprep.subr.mxu0 0.0
    %162 = vmatpush1.msra.mxu0 0.0
    %163 = vmatprep.subr.mxu0 0.0
    %164 = vmatpush1.msra.mxu0 0.0
    %165 = vmatprep.subr.mxu0 0.0
    %166 = vmatpush1.msra.mxu0 0.0
    %167 = vmatprep.subr.mxu0 0.0
    %168 = vmatpush1.msra.mxu0 0.0
    %169 = vmatprep.subr.mxu0 0.0
    %170 = vmatpush1.msra.mxu0 0.0
    %171 = vmatprep.subr.mxu0 0.0
    %172 = vmatpush1.msra.mxu0 0.0
    %173 = vmatprep.subr.mxu0 0.0
    %174 = vmatpush1.msra.mxu0 0.0
    %175 = vmatprep.subr.mxu0 0.0
    %176 = vmatpush1.msra.mxu0 0.0
    %177 = vmatprep.subr.mxu0 0.0
    %178 = vmatpush1.msra.mxu0 0.0
    %179 = vmatprep.subr.mxu0 0.0
    %180 = vmatpush1.msra.mxu0 0.0
    %181 = vmatprep.subr.mxu0 0.0
    %182 = vmatpush1.msra.mxu0 0.0
    %183 = vmatprep.subr.mxu0 0.0
    %184 = vmatpush1.msra.mxu0 0.0
    %185 = vmatprep.subr.mxu0 0.0
    %186 = vmatpush1.msra.mxu0 0.0
    %187 = vmatprep.subr.mxu0 0.0
    %188 = vmatpush1.msra.mxu0 0.0
    %189 = vmatprep.subr.mxu0 0.0
    %190 = vmatpush1.msra.mxu0 0.0
    %191 = vmatprep.subr.mxu0 0.0
    %192 = vmatpush1.msra.mxu0 0.0
    %193 = vmatprep.subr.mxu0 0.0
    %194 = vmatpush1.msra.mxu0 0.0
    %195 = vmatprep.subr.mxu0 0.0
    %196 = vmatpush1.msra.mxu0 0.0
    %197 = vmatprep.subr.mxu0 0.0
    %198 = vmatpush1.msra.mxu0 0.0
    %199 = vmatprep.subr.mxu0 0.0
    %200 = vmatpush1.msra.mxu0 0.0
    %201 = vmatprep.subr.mxu0 0.0
    %202 = vmatpush1.msra.mxu0 0.0
    %203 = vmatprep.mubr.f32.mxu0 0.0
    %204 = vmatmul.mubr.f32.gmra.mrb[0].mxu0 %v137
    %v205 = vpop.f32.mrb[0].mxu0
    %v206 = vadd.f32 %v133, %v205
    %v207 = vpop.f32.mrb[0].mxu0
    %208 = vdwg.mxu0
    %v209 = vmax.f32 %v206, 0.0
    %v210 = vld [vmem:[%s5] sm:$0xff]
    %v211 = vld [vmem:[%s5 + $0x8] sm:$0xff]
    %v212 = vld [vmem:[%s5 + $0x10] sm:$0xff]
    %v213 = vld [vmem:[%s5 + $0x18] sm:$0xff]
    %v214 = vld [vmem:[%s6] sm:$0x1]
    %v216 = vlaneseq
    %v217 = vshrl.u32 %v216, 7
    %v218 = vsub.s32 0, %v217
    %v219 = vrot.slane %v214, %v218
    %v222 = vsel %vm135, %v209, 0
    %224 = vmatprep.subr.mxu0 0.0
    %225 = vmatpush1.msra.mxu0 %v210
    %226 = vmatprep.subr.mxu0 0.0
    %227 = vmatpush1.msra.mxu0 %v211
    %228 = vmatprep.subr.mxu0 0.0
    %229 = vmatpush1.msra.mxu0 %v212
    %230 = vmatprep.subr.mxu0 0.0
    %231 = vmatpush1.msra.mxu0 %v213
    %232 = vmatprep.subr.mxu0 0.0
    %233 = vmatpush1.msra.mxu0 0.0
    %234 = vmatprep.subr.mxu0 0.0
    %235 = vmatpush1.msra.mxu0 0.0
    %236 = vmatprep.subr.mxu0 0.0
    %237 = vmatpush1.msra.mxu0 0.0
    %238 = vmatprep.subr.mxu0 0.0
    %239 = vmatpush1.msra.mxu0 0.0
    %240 = vmatprep.subr.mxu0 0.0
    %241 = vmatpush1.msra.mxu0 0.0
    %242 = vmatprep.subr.mxu0 0.0
    %243 = vmatpush1.msra.mxu0 0.0
    %244 = vmatprep.subr.mxu0 0.0
    %245 = vmatpush1.msra.mxu0 0.0
    %246 = vmatprep.subr.mxu0 0.0
    %247 = vmatpush1.msra.mxu0 0.0
    %248 = vmatprep.subr.mxu0 0.0
    %249 = vmatpush1.msra.mxu0 0.0
    %250 = vmatprep.subr.mxu0 0.0
    %251 = vmatpush1.msra.mxu0 0.0
    %252 = vmatprep.subr.mxu0 0.0
    %253 = vmatpush1.msra.mxu0 0.0
    %254 = vmatprep.subr.mxu0 0.0
    %255 = vmatpush1.msra.mxu0 0.0
    %256 = vmatprep.subr.mxu0 0.0
    %257 = vmatpush1.msra.mxu0 0.0
    %258 = vmatprep.subr.mxu0 0.0
    %259 = vmatpush1.msra.mxu0 0.0
    %260 = vmatprep.subr.mxu0 0.0
    %261 = vmatpush1.msra.mxu0 0.0
    %262 = vmatprep.subr.mxu0 0.0
    %263 = vmatpush1.msra.mxu0 0.0
    %264 = vmatprep.subr.mxu0 0.0
    %265 = vmatpush1.msra.mxu0 0.0
    %266 = vmatprep.subr.mxu0 0.0
    %267 = vmatpush1.msra.mxu0 0.0
    %268 = vmatprep.subr.mxu0 0.0
    %269 = vmatpush1.msra.mxu0 0.0
    %270 = vmatprep.subr.mxu0 0.0
    %271 = vmatpush1.msra.mxu0 0.0
    %272 = vmatprep.subr.mxu0 0.0
    %273 = vmatpush1.msra.mxu0 0.0
    %274 = vmatprep.subr.mxu0 0.0
    %275 = vmatpush1.msra.mxu0 0.0
    %276 = vmatprep.subr.mxu0 0.0
    %277 = vmatpush1.msra.mxu0 0.0
    %278 = vmatprep.subr.mxu0 0.0
    %279 = vmatpush1.msra.mxu0 0.0
    %280 = vmatprep.subr.mxu0 0.0
    %281 = vmatpush1.msra.mxu0 0.0
    %282 = vmatprep.subr.mxu0 0.0
    %283 = vmatpush1.msra.mxu0 0.0
    %284 = vmatprep.subr.mxu0 0.0
    %285 = vmatpush1.msra.mxu0 0.0
    %286 = vmatprep.subr.mxu0 0.0
    %287 = vmatpush1.msra.mxu0 0.0
    %288 = vmatprep.mubr.f32.mxu0 0.0
    %289 = vmatmul.mubr.f32.gmra.mrb[0].mxu0 %v222
    %v290 = vpop.f32.mrb[0].mxu0
    %v291 = vadd.f32 %v219, %v290
    %v292 = vpop.f32.mrb[0].mxu0
    %293 = vdwg.mxu0
    %vm294 = vcmask 64512
    %295 = vst.msk [vmem:[#allocation5] sm:$0xff] %vm294, %v291
    // Predicated region
    $region34: #{tpu_custom_call.1} parent=1 // pred_check
      _
    $region35: #{tpu_custom_call.1} parent=1 // pred_check_branch
      %297 = sbr.rel (0) target = $region37
    $region36: #{tpu_custom_call.1} parent=1 // pred_region
      %s299 = ssub.s32 128, 128
      %300 = vsyncadd [#allocation4], %s299
      %s302 = sshll.u32 [#allocation5], 4
      %s303 = int_to_ptr.vmem [resolvable:$true] %s302
      %305 = dma.vmem_to_hbm [thread:$0]  %s303, 128, %s7, [#allocation4]
    $region37: #{tpu_custom_call.1} parent=1 // pred_fallthru
      _
    // Predicated region
    $region38: #{tpu_custom_call.1} parent=1 // pred_check
      _
    $region39: #{tpu_custom_call.1} parent=1 // pred_check_branch
      %307 = sbr.rel (0) target = $region41
    $region40: #{tpu_custom_call.1} parent=1 // pred_region
      %308 = dma.done [#allocation4], 128
    $region41: #{tpu_custom_call.1} parent=1 // pred_fallthru
      _
    %309 = vsyncpa [#allocation3], 1
    %310 = vsyncpa [#allocation4], 1

</llo_original>
